<compile_context>
chip_gen: v5e
topology: v5e:2x2
jax: 0.10.0
libtpu: 0.0.40
codegen_flags: <defaults>
</compile_context>

<pallas_src>
import functools
import math

import numpy as np
import jax
import jax.numpy as jnp
from jax import lax
from jax.experimental import pallas as pl
from jax.experimental.pallas import tpu as pltpu


def build_position_encoding_table(d_model, max_sequence_len, zero_padding=True):
    """Deterministic sinusoidal table, identical to the PyTorch __init__."""
    pe = np.array(
        [
            [pos / np.power(10000, 2 * (i // 2) / d_model) for i in range(d_model)]
            for pos in range(max_sequence_len)
        ]
    )
    pe[:, 0::2] = np.sin(pe[:, 0::2])
    pe[:, 1::2] = np.cos(pe[:, 1::2])
    if zero_padding:
        pe = np.concatenate([np.zeros((1, d_model)), pe], axis=0)
    # torch path produced float64 (numpy default); we use float32.
    return jnp.asarray(pe, dtype=jnp.float32)  # (T, D)


def _pe_mask_kernel(lens_ref, table_ref, out_ref, *, d_model, tile_ld):
    # lens_ref:  (TB, 1)    int32 -- sequence lengths for this batch tile
    # table_ref: (1, TLD)   f32   -- lane tile of the flattened PE table (rows 0..L-1)
    # out_ref:   (TB, TLD)  f32   -- lane-dense output tile
    j = pl.program_id(1)
    # Global flat column index for this lane tile.  (flat col // d_model) is the
    # position index, so  col < len*d_model  <=>  position < len.
    col = j * tile_ld + lax.broadcasted_iota(jnp.int32, (1, tile_ld), 1)  # (1, TLD)
    lim = lens_ref[...] * d_model                                         # (TB, 1)
    # (1,TLD) vs (TB,1) broadcasts to (TB,TLD); jnp.where broadcasts the single
    # table row along sublanes -- no explicit tile-sized temporaries.
    out_ref[...] = jnp.where(col < lim, table_ref[...], jnp.float32(0.0)).astype(
        out_ref.dtype
    )


def positional_encoding_forward(
    input_lens,
    pe_table,
    *,
    max_len=None,
    batch_tile=256,   # must be a multiple of 8
    lane_tile=4096,   # must be a multiple of 128
):
    """Equivalent of PositionalEncoding.forward(input_lens) (zero_padding=True).

    If `max_len` is given (static int), the output has that many positions and no
    host read of the lengths is performed (jit-friendly).  Otherwise max_len is
    read from the data, exactly as in the torch module.
    """
    input_lens = jnp.asarray(input_lens, dtype=jnp.int32)
    B = int(input_lens.shape[0])
    T, D = pe_table.shape
    assert batch_tile % 8 == 0 and lane_tile % 128 == 0

    if max_len is None:
        # Output shape depends on the data, exactly as in torch -> one host read.
        # TODO(synk): data-dependent output shape; pass max_len= for a fully
        # jittable path.
        max_len = int(jax.device_get(jnp.max(input_lens)))
    max_len = int(max_len)
    if max_len <= 0:
        return jnp.zeros((B, 0, D), pe_table.dtype)
    if max_len > T:
        # torch's embedding gather would raise an index error here too.
        raise ValueError(f"max(input_lens)={max_len} exceeds table rows {T}")

    # Bucket L minimally so that L*D is a multiple of 128 (lane-dense blocks).
    # No bucketing at all when D is already a multiple of 128.
    q = 128 // math.gcd(D, 128)
    L = ((max_len + q - 1) // q) * q
    LD = L * D

    # Table rows 0..L-1, flattened lane-dense; zero-pad if the bucket overshoots
    # the table (those rows are masked out / sliced off, never observed).
    if L <= T:
        table_L = pe_table[:L]
    else:
        table_L = jnp.concatenate(
            [pe_table, jnp.zeros((L - T, D), pe_table.dtype)], axis=0
        )
    table_flat = table_L.reshape(1, LD)

    lens2d = input_lens.reshape(B, 1)

    TB = B if B <= batch_tile else batch_tile      # full dim or multiple of 8
    TLD = min(LD, lane_tile)                       # both multiples of 128
    nB = pl.cdiv(B, TB)
    nJ = pl.cdiv(LD, TLD)

    kernel = functools.partial(_pe_mask_kernel, d_model=D, tile_ld=TLD)

    out_flat = pl.pallas_call(
        kernel,
        out_shape=jax.ShapeDtypeStruct((B, LD), pe_table.dtype),
        grid_spec=pltpu.PrefetchScalarGridSpec(
            num_scalar_prefetch=0,
            grid=(nB, nJ),
            in_specs=[
                pl.BlockSpec((TB, 1), lambda b, j: (b, 0)),     # lengths
                pl.BlockSpec((1, TLD), lambda b, j: (0, j)),    # table lane tile
            ],
            out_specs=pl.BlockSpec((TB, TLD), lambda b, j: (b, j)),
        ),
        compiler_params=pltpu.CompilerParams(
            dimension_semantics=("parallel", "parallel"),
        ),
        cost_estimate=pl.CostEstimate(
            flops=2 * B * LD,
            transcendentals=0,
            bytes_accessed=(B * LD + LD + B) * 4,
        ),
    )(lens2d, table_flat)

    out = out_flat.reshape(B, L, D)      # free reshape, same layout
    if L != max_len:
        out = out[:, :max_len, :]        # only when D forces a (tiny) bucket
    return out


def _reference_check(out, lens, table, max_len=None):
    if max_len is None:
        max_len = int(jnp.max(lens))
    ar = jnp.arange(max_len)
    pos = jnp.where(ar[None, :] < lens[:, None], ar[None, :], 0)
    ref = jnp.take(table, pos, axis=0)
    np.testing.assert_allclose(np.asarray(out), np.asarray(ref), rtol=1e-6, atol=1e-6)


if __name__ == "__main__":
    d_model = 32
    max_sequence_len = 16  # table gets max_sequence_len+1 rows (zero_padding=True)
    pe_table = build_position_encoding_table(d_model, max_sequence_len)

    key = jax.random.PRNGKey(0)
    k1, k2 = jax.random.split(key)

    # 1) Small module-sized example (batch=4, lengths in [1, 8]).
    input_lens = jax.random.randint(k1, (4,), minval=1, maxval=9, dtype=jnp.int32)
    out = jax.block_until_ready(positional_encoding_forward(input_lens, pe_table))
    _reference_check(out, input_lens, pe_table)

    # 2) Exercise ragged batch tiles and multiple lane tiles (2-D grid path).
    input_lens2 = jax.random.randint(k2, (20,), minval=1, maxval=17, dtype=jnp.int32)
    out2 = jax.block_until_ready(
        positional_encoding_forward(
            input_lens2, pe_table, batch_tile=8, lane_tile=128
        )
    )
    _reference_check(out2, input_lens2, pe_table)

    # 3) Static max_len path (no device->host sync on the lengths).
    out3 = jax.block_until_ready(
        positional_encoding_forward(input_lens, pe_table, max_len=max_sequence_len)
    )
    _reference_check(out3, input_lens, pe_table, max_len=max_sequence_len)

    print("KERNEL_OK")
</pallas_src>

<mosaic_0001>
module attributes {stable_mosaic.version = 11 : i64} {
  func.func @_pe_mask_kernel(%arg0: i32, %arg1: i32, %arg2: memref<4x1xi32, #tpu.memory_space<vmem>>, %arg3: memref<1x256xf32, #tpu.memory_space<vmem>>, %arg4: memref<4x256xf32, #tpu.memory_space<vmem>>) attributes {dimension_semantics = [#tpu.dimension_semantics<parallel>, #tpu.dimension_semantics<parallel>], iteration_bounds = array<i64: 1, 1>, scalar_prefetch = 0 : i64, scratch_operands = 0 : i64, tpu.core_type = #tpu.core_type<tc>, window_params = [{transform_indices = @transform_0, window_bounds = array<i64: 4, 1>}, {transform_indices = @transform_1, window_bounds = array<i64: 1, 256>}, {transform_indices = @transform_2, window_bounds = array<i64: 4, 256>}]} {
    %c256_i32 = arith.constant 256 : i32
    %0 = arith.muli %arg1, %c256_i32 : i32
    %1 = tpu.iota {dimensions = array<i32: 1>} : vector<1x256xi32>
    %2 = vector.broadcast %0 : i32 to vector<1x256xi32>
    %3 = arith.addi %2, %1 : vector<1x256xi32>
    %c0 = arith.constant 0 : index
    %c0_0 = arith.constant 0 : index
    %4 = vector.load %arg2[%c0, %c0_0] : memref<4x1xi32, #tpu.memory_space<vmem>>, vector<4x1xi32>
    %c32_i32 = arith.constant 32 : i32
    %5 = vector.broadcast %c32_i32 : i32 to vector<4x1xi32>
    %6 = arith.muli %4, %5 : vector<4x1xi32>
    %7 = vector.broadcast %3 : vector<1x256xi32> to vector<4x256xi32>
    %8 = vector.broadcast %6 : vector<4x1xi32> to vector<4x256xi32>
    %9 = arith.cmpi slt, %7, %8 : vector<4x256xi32>
    %c0_1 = arith.constant 0 : index
    %c0_2 = arith.constant 0 : index
    %10 = vector.load %arg3[%c0_1, %c0_2] : memref<1x256xf32, #tpu.memory_space<vmem>>, vector<1x256xf32>
    %cst = arith.constant 0.000000e+00 : f32
    %11 = vector.shape_cast %10 : vector<1x256xf32> to vector<1x256xf32>
    %12 = vector.broadcast %11 : vector<1x256xf32> to vector<4x256xf32>
    %13 = vector.broadcast %cst : f32 to vector<4x256xf32>
    %14 = arith.select %9, %12, %13 : vector<4x256xi1>, vector<4x256xf32>
    %c0_3 = arith.constant 0 : index
    %c0_4 = arith.constant 0 : index
    %15 = vector.load %arg4[%c0_3, %c0_4] : memref<4x256xf32, #tpu.memory_space<vmem>>, vector<4x256xf32>
    tpu.vector_store %arg4[%c0_3, %c0_4], %14 {strides = array<i32>} : memref<4x256xf32, #tpu.memory_space<vmem>>, vector<4x256xf32>,
    return
  }
  func.func @transform_0(%arg0: i32, %arg1: i32) -> (i32, i32) {
    %c0_i32 = arith.constant 0 : i32
    %c0_i32_0 = arith.constant 0 : i32
    return %arg0, %c0_i32 : i32, i32
  }
  func.func @transform_1(%arg0: i32, %arg1: i32) -> (i32, i32) {
    %c0_i32 = arith.constant 0 : i32
    %c0_i32_0 = arith.constant 0 : i32
    return %c0_i32, %arg1 : i32, i32
  }
  func.func @transform_2(%arg0: i32, %arg1: i32) -> (i32, i32) {
    %c0_i32 = arith.constant 0 : i32
    return %arg0, %arg1 : i32, i32
  }
}

</mosaic_0001>

<llo_original>
// kernel: tpu_custom_call.1
$region0: #{tpu_custom_call.1}
  #allocation0 [shape = 'u32[]', space=smem, size = 0x4, offset = 0x4, fixed_abs, tag = 'smem constant byte address 0x4 - core index']
  #allocation1 [shape = 'u32[72,128]{1,0:T(1,128)}', space=vmem, size = 0x9000, scoped, tag = 'internal scratch']
  %s0 = inlined_call_operand.vmem [shape: s32[4,1], index: 0, kind: input, shape index: {}]
  %s1 = inlined_call_operand.vmem [shape: f32[1,256], index: 1, kind: input, shape index: {}]
  %s2 = inlined_call_operand.hbm [shape: f32[4,256], index: 2, kind: output, shape index: {}]
  %s3 = sld [smem:[#allocation0]]
  $region18: #{tpu_custom_call.1} parent=0
    _
  %s5 = ssub.s32 1, %s3
  %s6 = scalar_select 0, %s5, %s3
  $region1: #{tpu_custom_call.1} parent=0
    #allocation2 [shape = 'u8[4096]{0}', space=vmem, size = 0x1000, scoped, tag = 'output window, operand 0, single buffered']
    #allocation3 [shape = 's32[1]{0}', space=sflag, size = 0x4, scoped, tag = 'scoped memory for tpu_custom_call.1']
    %7 = vsyncpa [#allocation3], 0
    // Predicated region
    $region2: #{tpu_custom_call.1} parent=1 // pred_check
      _
    $region3: #{tpu_custom_call.1} parent=1 // pred_check_branch
      %9 = sbr.rel (0) target = $region5
    $region4: #{tpu_custom_call.1} parent=1 // pred_region
      _
    $region5: #{tpu_custom_call.1} parent=1 // pred_fallthru
      _
    // Predicated region
    $region6: #{tpu_custom_call.1} parent=1 // pred_check
      _
    $region7: #{tpu_custom_call.1} parent=1 // pred_check_branch
      %11 = sbr.rel (0) target = $region9
    $region8: #{tpu_custom_call.1} parent=1 // pred_region
      _
    $region9: #{tpu_custom_call.1} parent=1 // pred_fallthru
      _
    %s12 = smul.u32 0, 256
    %v13 = vlaneseq
    %v14 = vand.u32 %v13, 127
    %v15 = vadd.s32 %v14, 128
    %v16 = vstv %s12
    %v17 = vadd.s32 %v16, %v14
    %v18 = vadd.s32 %v16, %v15
    %v19 = vld [vmem:[%s0] sm:$0xf]
    %v20 = vmul.u32 %v19, 32
    %21 = vset.pattern.permute.xlu0 0
    %22 = vperm.xlu0 %21, %v20
    %v23 = vpop.permute.xlu0 %22
    %vm24 = vcmp.lt.s32.totalorder %v17, %v23
    %vm25 = vcmp.lt.s32.totalorder %v18, %v23
    %v26 = vld [vmem:[%s1] sm:$0x3]
    %v28 = vperm.slane %v26, 0
    %v29 = vperm.slane %v26, 1
    %v32 = vsel %vm24, %v28, 0.0
    %v33 = vsel %vm25, %v29, 0.0
    %v36 = vrot.slane %v33, 4
    %vm37 = vcmask 1043456
    %v38 = vsel %vm37, %v32, %v36
    %40 = vst [vmem:[#allocation2] sm:$0xff] %v38
    // Predicated region
    $region10: #{tpu_custom_call.1} parent=1 // pred_check
      _
    $region11: #{tpu_custom_call.1} parent=1 // pred_check_branch
      %42 = sbr.rel (0) target = $region13
    $region12: #{tpu_custom_call.1} parent=1 // pred_region
      %44 = vsyncadd [#allocation3], 0
      %s46 = sshll.u32 [#allocation2], 4
      %s47 = int_to_ptr.vmem [resolvable:$true] %s46
      %s48 = sshll.u32 %s2, 4
      %s49 = int_to_ptr.hbm [resolvable:$true] %s48
      %51 = dma.vmem_to_hbm [thread:$0]  %s47, 128, %s49, [#allocation3]
    $region13: #{tpu_custom_call.1} parent=1 // pred_fallthru
      _
    // Predicated region
    $region14: #{tpu_custom_call.1} parent=1 // pred_check
      _
    $region15: #{tpu_custom_call.1} parent=1 // pred_check_branch
      %53 = sbr.rel (0) target = $region17
    $region16: #{tpu_custom_call.1} parent=1 // pred_region
      %55 = dma.done [#allocation3], 128
    $region17: #{tpu_custom_call.1} parent=1 // pred_fallthru
      _
    %56 = vsyncpa [#allocation3], 1

</llo_original>
